<compile_context>
chip_gen: v6e
topology: v6e:2x2x1
jax: 0.10.0
libtpu: 0.0.40
codegen_flags: <defaults>
</compile_context>

<pallas_src>
import functools
import math

import jax
import jax.numpy as jnp
from jax.experimental import pallas as pl
from jax.experimental.pallas import tpu as pltpu


def _round_up(n, m):
    return (n + m - 1) // m * m


def gru_model_kernel(x_ref, slab_ref, o_ref, *, H, offs):
    """Whole forward pass (last GRU-batch row only) in one kernel.

    x_ref    : (L, F)        x[:, -1, :] -- the only batch row that reaches the output
    slab_ref : (rows, 128)   packed parameter slab (see pack_kernel_params)
    o_ref    : (L, 128)      lane-dense output; cols [0:n_future] hold the fc result
    """
    L, F = x_ref.shape
    H3 = 3 * H
    r_win, r_whh, r_bin, r_bhn, r_wf, r_bf = offs

    # Static, aligned views into the parameter slab (hoisted loads).
    w_in = slab_ref[r_win:r_win + F, 0:H3]        # (F, 3H) fused emb + input gates [r|z|n]
    whh = slab_ref[r_whh:r_whh + H, 0:H3]         # (H, 3H) hidden gates [r|z|n]
    b_in = slab_ref[r_bin:r_bin + 1, 0:H3]        # (1, 3H) fused input-side bias
    bhn_pad = slab_ref[r_bhn:r_bhn + 1, 0:H3]     # (1, 3H) b_hn, zeros in r/z lanes
    wf = slab_ref[r_wf:r_wf + H, :]               # (H, 128) fc weight, lane-padded
    bf = slab_ref[r_bf:r_bf + 1, :]               # (1, 128) fc bias, lane-padded

    # All timesteps' input contributions in one matmul: (L, 3H).
    ix = jnp.dot(x_ref[...], w_in, preferred_element_type=jnp.float32) + b_in
    # Pre-split gate groups once (off the serial chain) so in-loop slices are sublane-only.
    ix_rz = ix[:, 0:2 * H]                        # (L, 2H)
    ix_n = ix[:, 2 * H:H3]                        # (L, H)

    h = jnp.zeros((1, H), dtype=jnp.float32)
    hs = []
    for t in range(L):  # L is small & static -> fully unrolled
        # (1, 3H) hidden contribution; bhn added full-width (zeros outside the n lanes).
        hh = jnp.dot(h, whh, preferred_element_type=jnp.float32) + bhn_pad
        rz = jax.nn.sigmoid(ix_rz[t:t + 1, :] + hh[:, 0:2 * H])   # (1, 2H)
        r = rz[:, 0:H]
        z = rz[:, H:2 * H]
        n = jnp.tanh(ix_n[t:t + 1, :] + r * hh[:, 2 * H:H3])
        h = n + z * (h - n)                        # == (1 - z) * n + z * h
        hs.append(h)                               # == out[t, -1, :]

    hlast = jnp.concatenate(hs, axis=0)            # (L, H), stays in vregs

    # fc: Linear(H -> n_future); lane-dense zero-padded store (single unmasked vst).
    o_ref[...] = jnp.dot(hlast, wf, preferred_element_type=jnp.float32) + bf


def gru_model_forward(x, kparams):
    """x: (seq_len, n_past, n_feature) -> (seq_len, n_future)."""
    L, B, F = x.shape
    meta = kparams["meta"]
    H, NF, lanes = meta["H"], meta["NF"], meta["lanes"]

    # Only GRU-batch row B-1 ever reaches fc(out[:, -1, :]); drop the dead rows here.
    x_last = x[:, B - 1, :]                        # (L, F) — free layout plumbing

    vmem = pl.BlockSpec(memory_space=pltpu.MemorySpace.VMEM)
    # NOTE: for many independent forwards, wrap this with a leading "parallel" grid axis
    # (compiler_params=pltpu.CompilerParams(dimension_semantics=("parallel",))) so both
    # v7x TensorCores are used; a single forward is launch/serial-latency bound and needs
    # no grid, no vmem_limit (working set << 1 MiB).
    out_pad = pl.pallas_call(
        functools.partial(gru_model_kernel, H=H, offs=meta["offs"]),
        out_shape=jax.ShapeDtypeStruct((L, lanes), jnp.float32),
        in_specs=[vmem, vmem],
        out_specs=vmem,
    )(x_last, kparams["slab"])
    return out_pad[:, :NF]


def init_torch_params(key, F, E, H, NF):
    """PyTorch-layout parameters with PyTorch-style uniform(-1/sqrt(fan_in), ...) init."""
    ks = jax.random.split(key, 8)

    def unif(k, shape, fan_in):
        bound = 1.0 / math.sqrt(fan_in)
        return jax.random.uniform(k, shape, jnp.float32, -bound, bound)

    return {
        "w_emb": unif(ks[0], (E, F), F),      # embedding.weight (E, F)
        "b_emb": unif(ks[1], (E,), F),        # embedding.bias
        "w_ih": unif(ks[2], (3 * H, E), H),   # gru.weight_ih_l0, gate order [r, z, n]
        "w_hh": unif(ks[3], (3 * H, H), H),   # gru.weight_hh_l0
        "b_ih": unif(ks[4], (3 * H,), H),     # gru.bias_ih_l0
        "b_hh": unif(ks[5], (3 * H,), H),     # gru.bias_hh_l0
        "w_fc": unif(ks[6], (NF, H), H),      # fc.weight (NF, H)
        "b_fc": unif(ks[7], (NF,), H),        # fc.bias
    }


def pack_kernel_params(tp):
    """Repack PyTorch-layout params into one zero-padded (rows, 128) f32 parameter slab."""
    E, F = tp["w_emb"].shape
    H = tp["w_hh"].shape[1]
    NF = tp["w_fc"].shape[0]
    H3 = 3 * H

    wi_cat = tp["w_ih"].T                      # (E, 3H), columns in [r|z|n] order
    whh_cat = tp["w_hh"].T                     # (H, 3H)

    # Fuse embedding into the input-gate matmul: (F, E) @ (E, 3H) -> (F, 3H).
    w_in = tp["w_emb"].T @ wi_cat

    # Fold biases: embedding bias pushed through Wi, + b_ih, + the r/z parts of b_hh
    # (the n part of b_hh must stay inside the r*(...) term -> stored separately, padded).
    bhh_rz = jnp.concatenate(
        [tp["b_hh"][0:H], tp["b_hh"][H:2 * H], jnp.zeros((H,), jnp.float32)])
    b_in = (tp["b_emb"][None, :] @ wi_cat)[0] + tp["b_ih"] + bhh_rz        # (3H,)

    lanes = _round_up(max(H3, NF, F), 128)
    r_win = 0
    r_whh = r_win + _round_up(F, 8)
    r_bin = r_whh + _round_up(H, 8)
    r_bhn = r_bin + 8
    r_wf = r_bhn + 8
    r_bf = r_wf + _round_up(H, 8)
    rows = _round_up(r_bf + 1, 8)

    slab = jnp.zeros((rows, lanes), jnp.float32)
    slab = slab.at[r_win:r_win + F, 0:H3].set(w_in)
    slab = slab.at[r_whh:r_whh + H, 0:H3].set(whh_cat)
    slab = slab.at[r_bin, 0:H3].set(b_in)
    slab = slab.at[r_bhn, 2 * H:H3].set(tp["b_hh"][2 * H:H3])   # pre-padded b_hn row
    slab = slab.at[r_wf:r_wf + H, 0:NF].set(tp["w_fc"].T)       # lane-padded fc weight
    slab = slab.at[r_bf, 0:NF].set(tp["b_fc"])                  # lane-padded fc bias

    return {
        "slab": slab,
        "meta": {"H": H, "NF": NF, "lanes": lanes,
                 "offs": (r_win, r_whh, r_bin, r_bhn, r_wf, r_bf)},
    }


def reference_forward(x, tp):
    """Pure-JAX reference matching the PyTorch forward (unfused math, full batch)."""
    L, B, _ = x.shape
    H = tp["w_hh"].shape[1]
    emb = x @ tp["w_emb"].T + tp["b_emb"]      # (L, B, E)

    w_ir, w_iz, w_in = (tp["w_ih"][0:H].T, tp["w_ih"][H:2 * H].T, tp["w_ih"][2 * H:].T)
    w_hr, w_hz, w_hn = (tp["w_hh"][0:H].T, tp["w_hh"][H:2 * H].T, tp["w_hh"][2 * H:].T)
    b_ir, b_iz, b_in = (tp["b_ih"][0:H], tp["b_ih"][H:2 * H], tp["b_ih"][2 * H:])
    b_hr, b_hz, b_hn = (tp["b_hh"][0:H], tp["b_hh"][H:2 * H], tp["b_hh"][2 * H:])

    h = jnp.zeros((B, H), jnp.float32)
    last_rows = []
    for t in range(L):
        e_t = emb[t]
        r = jax.nn.sigmoid(e_t @ w_ir + b_ir + h @ w_hr + b_hr)
        z = jax.nn.sigmoid(e_t @ w_iz + b_iz + h @ w_hz + b_hz)
        n = jnp.tanh(e_t @ w_in + b_in + r * (h @ w_hn + b_hn))
        h = (1.0 - z) * n + z * h
        last_rows.append(h[B - 1])             # out[t, -1, :]
    last = jnp.stack(last_rows, axis=0)        # (L, H)
    return last @ tp["w_fc"].T + tp["b_fc"]    # (L, NF)


if __name__ == "__main__":
    # Small shapes consistent with the module:
    L = 8      # sequence length
    B = 8      # n_past (GRU batch dim, per h = zeros(1, n_past, dim_model))
    F = 8      # n_feature
    E = 16     # dim_embed
    H = 32     # dim_model
    NF = 4     # n_future

    key = jax.random.PRNGKey(0)
    kx, kp = jax.random.split(key)
    x = jax.random.normal(kx, (L, B, F), dtype=jnp.float32)

    torch_params = init_torch_params(kp, F, E, H, NF)
    kernel_params = pack_kernel_params(torch_params)

    out = gru_model_forward(x, kernel_params)
    out = jax.block_until_ready(out)
    assert out.shape == (L, NF), out.shape

    ref = reference_forward(x, torch_params)
    if not jnp.allclose(out, ref, atol=1e-3, rtol=1e-3):
        raise AssertionError("Pallas kernel output mismatch vs reference")

    print("KERNEL_OK")
</pallas_src>

<mosaic_0001>
module attributes {stable_mosaic.version = 11 : i64} {
  func.func @gru_model_kernel(%arg0: memref<8x8xf32, #tpu.memory_space<vmem>>, %arg1: memref<96x128xf32, #tpu.memory_space<vmem>>, %arg2: memref<8x128xf32, #tpu.memory_space<vmem>>) attributes {dimension_semantics = [], scalar_prefetch = 0 : i64, scratch_operands = 0 : i64, tpu.core_type = #tpu.core_type<tc>} {
    %c0 = arith.constant 0 : index
    %c0_0 = arith.constant 0 : index
    %0 = vector.load %arg1[%c0, %c0_0] : memref<96x128xf32, #tpu.memory_space<vmem>>, vector<8x96xf32>
    %c8 = arith.constant 8 : index
    %c0_1 = arith.constant 0 : index
    %1 = vector.load %arg1[%c8, %c0_1] : memref<96x128xf32, #tpu.memory_space<vmem>>, vector<32x96xf32>
    %c40 = arith.constant 40 : index
    %c0_2 = arith.constant 0 : index
    %2 = vector.load %arg1[%c40, %c0_2] : memref<96x128xf32, #tpu.memory_space<vmem>>, vector<1x96xf32>
    %c48 = arith.constant 48 : index
    %c0_3 = arith.constant 0 : index
    %3 = vector.load %arg1[%c48, %c0_3] : memref<96x128xf32, #tpu.memory_space<vmem>>, vector<1x96xf32>
    %c56 = arith.constant 56 : index
    %c0_4 = arith.constant 0 : index
    %4 = vector.load %arg1[%c56, %c0_4] : memref<96x128xf32, #tpu.memory_space<vmem>>, vector<32x128xf32>
    %c88 = arith.constant 88 : index
    %c0_5 = arith.constant 0 : index
    %5 = vector.load %arg1[%c88, %c0_5] : memref<96x128xf32, #tpu.memory_space<vmem>>, vector<1x128xf32>
    %c0_6 = arith.constant 0 : index
    %c0_7 = arith.constant 0 : index
    %6 = vector.load %arg0[%c0_6, %c0_7] : memref<8x8xf32, #tpu.memory_space<vmem>>, vector<8x8xf32>
    %cst = arith.constant dense<0.000000e+00> : vector<8x96xf32>
    %7 = tpu.matmul %6, %0, %cst {dimension_numbers = #tpu.dot_dimension_numbers<[1], [0], [0], [1], [0, 0, 1, 1], [], []>} : vector<8x8xf32>, vector<8x96xf32>, vector<8x96xf32> -> vector<8x96xf32>
    %8 = vector.broadcast %2 : vector<1x96xf32> to vector<8x96xf32>
    %9 = arith.addf %7, %8 : vector<8x96xf32>
    %10 = vector.extract_strided_slice %9 {offsets = [0, 0], sizes = [8, 64], strides = [1, 1]} : vector<8x96xf32> to vector<8x64xf32>
    %11 = vector.extract_strided_slice %9 {offsets = [0, 64], sizes = [8, 32], strides = [1, 1]} : vector<8x96xf32> to vector<8x32xf32>
    %cst_8 = arith.constant 0.000000e+00 : f32
    %12 = vector.broadcast %cst_8 : f32 to vector<1x32xf32>
    %cst_9 = arith.constant dense<0.000000e+00> : vector<1x96xf32>
    %13 = tpu.matmul %12, %1, %cst_9 {dimension_numbers = #tpu.dot_dimension_numbers<[1], [0], [0], [1], [0, 0, 1, 1], [], []>} : vector<1x32xf32>, vector<32x96xf32>, vector<1x96xf32> -> vector<1x96xf32>
    %14 = arith.addf %13, %3 : vector<1x96xf32>
    %15 = vector.extract_strided_slice %10 {offsets = [0, 0], sizes = [1, 64], strides = [1, 1]} : vector<8x64xf32> to vector<1x64xf32>
    %16 = vector.extract_strided_slice %14 {offsets = [0, 0], sizes = [1, 64], strides = [1, 1]} : vector<1x96xf32> to vector<1x64xf32>
    %17 = arith.addf %15, %16 : vector<1x64xf32>
    %18 = arith.negf %17 : vector<1x64xf32>
    %19 = math.exp %18 : vector<1x64xf32>
    %cst_10 = arith.constant 1.000000e+00 : f32
    %20 = vector.broadcast %cst_10 : f32 to vector<1x64xf32>
    %21 = arith.addf %20, %19 : vector<1x64xf32>
    %22 = arith.divf %20, %21 : vector<1x64xf32>
    %23 = vector.extract_strided_slice %22 {offsets = [0, 0], sizes = [1, 32], strides = [1, 1]} : vector<1x64xf32> to vector<1x32xf32>
    %24 = vector.extract_strided_slice %22 {offsets = [0, 32], sizes = [1, 32], strides = [1, 1]} : vector<1x64xf32> to vector<1x32xf32>
    %25 = vector.extract_strided_slice %11 {offsets = [0, 0], sizes = [1, 32], strides = [1, 1]} : vector<8x32xf32> to vector<1x32xf32>
    %26 = vector.extract_strided_slice %14 {offsets = [0, 64], sizes = [1, 32], strides = [1, 1]} : vector<1x96xf32> to vector<1x32xf32>
    %27 = arith.mulf %23, %26 : vector<1x32xf32>
    %28 = arith.addf %25, %27 : vector<1x32xf32>
    %29 = math.tanh %28 : vector<1x32xf32>
    %30 = arith.subf %12, %29 : vector<1x32xf32>
    %31 = arith.mulf %24, %30 : vector<1x32xf32>
    %32 = arith.addf %29, %31 : vector<1x32xf32>
    %cst_11 = arith.constant dense<0.000000e+00> : vector<1x96xf32>
    %33 = tpu.matmul %32, %1, %cst_11 {dimension_numbers = #tpu.dot_dimension_numbers<[1], [0], [0], [1], [0, 0, 1, 1], [], []>} : vector<1x32xf32>, vector<32x96xf32>, vector<1x96xf32> -> vector<1x96xf32>
    %34 = arith.addf %33, %3 : vector<1x96xf32>
    %35 = vector.extract_strided_slice %10 {offsets = [1, 0], sizes = [1, 64], strides = [1, 1]} : vector<8x64xf32> to vector<1x64xf32>
    %36 = vector.extract_strided_slice %34 {offsets = [0, 0], sizes = [1, 64], strides = [1, 1]} : vector<1x96xf32> to vector<1x64xf32>
    %37 = arith.addf %35, %36 : vector<1x64xf32>
    %38 = arith.negf %37 : vector<1x64xf32>
    %39 = math.exp %38 : vector<1x64xf32>
    %cst_12 = arith.constant 1.000000e+00 : f32
    %40 = vector.broadcast %cst_12 : f32 to vector<1x64xf32>
    %41 = arith.addf %40, %39 : vector<1x64xf32>
    %42 = arith.divf %40, %41 : vector<1x64xf32>
    %43 = vector.extract_strided_slice %42 {offsets = [0, 0], sizes = [1, 32], strides = [1, 1]} : vector<1x64xf32> to vector<1x32xf32>
    %44 = vector.extract_strided_slice %42 {offsets = [0, 32], sizes = [1, 32], strides = [1, 1]} : vector<1x64xf32> to vector<1x32xf32>
    %45 = vector.extract_strided_slice %11 {offsets = [1, 0], sizes = [1, 32], strides = [1, 1]} : vector<8x32xf32> to vector<1x32xf32>
    %46 = vector.extract_strided_slice %34 {offsets = [0, 64], sizes = [1, 32], strides = [1, 1]} : vector<1x96xf32> to vector<1x32xf32>
    %47 = arith.mulf %43, %46 : vector<1x32xf32>
    %48 = arith.addf %45, %47 : vector<1x32xf32>
    %49 = math.tanh %48 : vector<1x32xf32>
    %50 = arith.subf %32, %49 : vector<1x32xf32>
    %51 = arith.mulf %44, %50 : vector<1x32xf32>
    %52 = arith.addf %49, %51 : vector<1x32xf32>
    %cst_13 = arith.constant dense<0.000000e+00> : vector<1x96xf32>
    %53 = tpu.matmul %52, %1, %cst_13 {dimension_numbers = #tpu.dot_dimension_numbers<[1], [0], [0], [1], [0, 0, 1, 1], [], []>} : vector<1x32xf32>, vector<32x96xf32>, vector<1x96xf32> -> vector<1x96xf32>
    %54 = arith.addf %53, %3 : vector<1x96xf32>
    %55 = vector.extract_strided_slice %10 {offsets = [2, 0], sizes = [1, 64], strides = [1, 1]} : vector<8x64xf32> to vector<1x64xf32>
    %56 = vector.extract_strided_slice %54 {offsets = [0, 0], sizes = [1, 64], strides = [1, 1]} : vector<1x96xf32> to vector<1x64xf32>
    %57 = arith.addf %55, %56 : vector<1x64xf32>
    %58 = arith.negf %57 : vector<1x64xf32>
    %59 = math.exp %58 : vector<1x64xf32>
    %cst_14 = arith.constant 1.000000e+00 : f32
    %60 = vector.broadcast %cst_14 : f32 to vector<1x64xf32>
    %61 = arith.addf %60, %59 : vector<1x64xf32>
    %62 = arith.divf %60, %61 : vector<1x64xf32>
    %63 = vector.extract_strided_slice %62 {offsets = [0, 0], sizes = [1, 32], strides = [1, 1]} : vector<1x64xf32> to vector<1x32xf32>
    %64 = vector.extract_strided_slice %62 {offsets = [0, 32], sizes = [1, 32], strides = [1, 1]} : vector<1x64xf32> to vector<1x32xf32>
    %65 = vector.extract_strided_slice %11 {offsets = [2, 0], sizes = [1, 32], strides = [1, 1]} : vector<8x32xf32> to vector<1x32xf32>
    %66 = vector.extract_strided_slice %54 {offsets = [0, 64], sizes = [1, 32], strides = [1, 1]} : vector<1x96xf32> to vector<1x32xf32>
    %67 = arith.mulf %63, %66 : vector<1x32xf32>
    %68 = arith.addf %65, %67 : vector<1x32xf32>
    %69 = math.tanh %68 : vector<1x32xf32>
    %70 = arith.subf %52, %69 : vector<1x32xf32>
    %71 = arith.mulf %64, %70 : vector<1x32xf32>
    %72 = arith.addf %69, %71 : vector<1x32xf32>
    %cst_15 = arith.constant dense<0.000000e+00> : vector<1x96xf32>
    %73 = tpu.matmul %72, %1, %cst_15 {dimension_numbers = #tpu.dot_dimension_numbers<[1], [0], [0], [1], [0, 0, 1, 1], [], []>} : vector<1x32xf32>, vector<32x96xf32>, vector<1x96xf32> -> vector<1x96xf32>
    %74 = arith.addf %73, %3 : vector<1x96xf32>
    %75 = vector.extract_strided_slice %10 {offsets = [3, 0], sizes = [1, 64], strides = [1, 1]} : vector<8x64xf32> to vector<1x64xf32>
    %76 = vector.extract_strided_slice %74 {offsets = [0, 0], sizes = [1, 64], strides = [1, 1]} : vector<1x96xf32> to vector<1x64xf32>
    %77 = arith.addf %75, %76 : vector<1x64xf32>
    %78 = arith.negf %77 : vector<1x64xf32>
    %79 = math.exp %78 : vector<1x64xf32>
    %cst_16 = arith.constant 1.000000e+00 : f32
    %80 = vector.broadcast %cst_16 : f32 to vector<1x64xf32>
    %81 = arith.addf %80, %79 : vector<1x64xf32>
    %82 = arith.divf %80, %81 : vector<1x64xf32>
    %83 = vector.extract_strided_slice %82 {offsets = [0, 0], sizes = [1, 32], strides = [1, 1]} : vector<1x64xf32> to vector<1x32xf32>
    %84 = vector.extract_strided_slice %82 {offsets = [0, 32], sizes = [1, 32], strides = [1, 1]} : vector<1x64xf32> to vector<1x32xf32>
    %85 = vector.extract_strided_slice %11 {offsets = [3, 0], sizes = [1, 32], strides = [1, 1]} : vector<8x32xf32> to vector<1x32xf32>
    %86 = vector.extract_strided_slice %74 {offsets = [0, 64], sizes = [1, 32], strides = [1, 1]} : vector<1x96xf32> to vector<1x32xf32>
    %87 = arith.mulf %83, %86 : vector<1x32xf32>
    %88 = arith.addf %85, %87 : vector<1x32xf32>
    %89 = math.tanh %88 : vector<1x32xf32>
    %90 = arith.subf %72, %89 : vector<1x32xf32>
    %91 = arith.mulf %84, %90 : vector<1x32xf32>
    %92 = arith.addf %89, %91 : vector<1x32xf32>
    %cst_17 = arith.constant dense<0.000000e+00> : vector<1x96xf32>
    %93 = tpu.matmul %92, %1, %cst_17 {dimension_numbers = #tpu.dot_dimension_numbers<[1], [0], [0], [1], [0, 0, 1, 1], [], []>} : vector<1x32xf32>, vector<32x96xf32>, vector<1x96xf32> -> vector<1x96xf32>
    %94 = arith.addf %93, %3 : vector<1x96xf32>
    %95 = vector.extract_strided_slice %10 {offsets = [4, 0], sizes = [1, 64], strides = [1, 1]} : vector<8x64xf32> to vector<1x64xf32>
    %96 = vector.extract_strided_slice %94 {offsets = [0, 0], sizes = [1, 64], strides = [1, 1]} : vector<1x96xf32> to vector<1x64xf32>
    %97 = arith.addf %95, %96 : vector<1x64xf32>
    %98 = arith.negf %97 : vector<1x64xf32>
    %99 = math.exp %98 : vector<1x64xf32>
    %cst_18 = arith.constant 1.000000e+00 : f32
    %100 = vector.broadcast %cst_18 : f32 to vector<1x64xf32>
    %101 = arith.addf %100, %99 : vector<1x64xf32>
    %102 = arith.divf %100, %101 : vector<1x64xf32>
    %103 = vector.extract_strided_slice %102 {offsets = [0, 0], sizes = [1, 32], strides = [1, 1]} : vector<1x64xf32> to vector<1x32xf32>
    %104 = vector.extract_strided_slice %102 {offsets = [0, 32], sizes = [1, 32], strides = [1, 1]} : vector<1x64xf32> to vector<1x32xf32>
    %105 = vector.extract_strided_slice %11 {offsets = [4, 0], sizes = [1, 32], strides = [1, 1]} : vector<8x32xf32> to vector<1x32xf32>
    %106 = vector.extract_strided_slice %94 {offsets = [0, 64], sizes = [1, 32], strides = [1, 1]} : vector<1x96xf32> to vector<1x32xf32>
    %107 = arith.mulf %103, %106 : vector<1x32xf32>
    %108 = arith.addf %105, %107 : vector<1x32xf32>
    %109 = math.tanh %108 : vector<1x32xf32>
    %110 = arith.subf %92, %109 : vector<1x32xf32>
    %111 = arith.mulf %104, %110 : vector<1x32xf32>
    %112 = arith.addf %109, %111 : vector<1x32xf32>
    %cst_19 = arith.constant dense<0.000000e+00> : vector<1x96xf32>
    %113 = tpu.matmul %112, %1, %cst_19 {dimension_numbers = #tpu.dot_dimension_numbers<[1], [0], [0], [1], [0, 0, 1, 1], [], []>} : vector<1x32xf32>, vector<32x96xf32>, vector<1x96xf32> -> vector<1x96xf32>
    %114 = arith.addf %113, %3 : vector<1x96xf32>
    %115 = vector.extract_strided_slice %10 {offsets = [5, 0], sizes = [1, 64], strides = [1, 1]} : vector<8x64xf32> to vector<1x64xf32>
    %116 = vector.extract_strided_slice %114 {offsets = [0, 0], sizes = [1, 64], strides = [1, 1]} : vector<1x96xf32> to vector<1x64xf32>
    %117 = arith.addf %115, %116 : vector<1x64xf32>
    %118 = arith.negf %117 : vector<1x64xf32>
    %119 = math.exp %118 : vector<1x64xf32>
    %cst_20 = arith.constant 1.000000e+00 : f32
    %120 = vector.broadcast %cst_20 : f32 to vector<1x64xf32>
    %121 = arith.addf %120, %119 : vector<1x64xf32>
    %122 = arith.divf %120, %121 : vector<1x64xf32>
    %123 = vector.extract_strided_slice %122 {offsets = [0, 0], sizes = [1, 32], strides = [1, 1]} : vector<1x64xf32> to vector<1x32xf32>
    %124 = vector.extract_strided_slice %122 {offsets = [0, 32], sizes = [1, 32], strides = [1, 1]} : vector<1x64xf32> to vector<1x32xf32>
    %125 = vector.extract_strided_slice %11 {offsets = [5, 0], sizes = [1, 32], strides = [1, 1]} : vector<8x32xf32> to vector<1x32xf32>
    %126 = vector.extract_strided_slice %114 {offsets = [0, 64], sizes = [1, 32], strides = [1, 1]} : vector<1x96xf32> to vector<1x32xf32>
    %127 = arith.mulf %123, %126 : vector<1x32xf32>
    %128 = arith.addf %125, %127 : vector<1x32xf32>
    %129 = math.tanh %128 : vector<1x32xf32>
    %130 = arith.subf %112, %129 : vector<1x32xf32>
    %131 = arith.mulf %124, %130 : vector<1x32xf32>
    %132 = arith.addf %129, %131 : vector<1x32xf32>
    %cst_21 = arith.constant dense<0.000000e+00> : vector<1x96xf32>
    %133 = tpu.matmul %132, %1, %cst_21 {dimension_numbers = #tpu.dot_dimension_numbers<[1], [0], [0], [1], [0, 0, 1, 1], [], []>} : vector<1x32xf32>, vector<32x96xf32>, vector<1x96xf32> -> vector<1x96xf32>
    %134 = arith.addf %133, %3 : vector<1x96xf32>
    %135 = vector.extract_strided_slice %10 {offsets = [6, 0], sizes = [1, 64], strides = [1, 1]} : vector<8x64xf32> to vector<1x64xf32>
    %136 = vector.extract_strided_slice %134 {offsets = [0, 0], sizes = [1, 64], strides = [1, 1]} : vector<1x96xf32> to vector<1x64xf32>
    %137 = arith.addf %135, %136 : vector<1x64xf32>
    %138 = arith.negf %137 : vector<1x64xf32>
    %139 = math.exp %138 : vector<1x64xf32>
    %cst_22 = arith.constant 1.000000e+00 : f32
    %140 = vector.broadcast %cst_22 : f32 to vector<1x64xf32>
    %141 = arith.addf %140, %139 : vector<1x64xf32>
    %142 = arith.divf %140, %141 : vector<1x64xf32>
    %143 = vector.extract_strided_slice %142 {offsets = [0, 0], sizes = [1, 32], strides = [1, 1]} : vector<1x64xf32> to vector<1x32xf32>
    %144 = vector.extract_strided_slice %142 {offsets = [0, 32], sizes = [1, 32], strides = [1, 1]} : vector<1x64xf32> to vector<1x32xf32>
    %145 = vector.extract_strided_slice %11 {offsets = [6, 0], sizes = [1, 32], strides = [1, 1]} : vector<8x32xf32> to vector<1x32xf32>
    %146 = vector.extract_strided_slice %134 {offsets = [0, 64], sizes = [1, 32], strides = [1, 1]} : vector<1x96xf32> to vector<1x32xf32>
    %147 = arith.mulf %143, %146 : vector<1x32xf32>
    %148 = arith.addf %145, %147 : vector<1x32xf32>
    %149 = math.tanh %148 : vector<1x32xf32>
    %150 = arith.subf %132, %149 : vector<1x32xf32>
    %151 = arith.mulf %144, %150 : vector<1x32xf32>
    %152 = arith.addf %149, %151 : vector<1x32xf32>
    %cst_23 = arith.constant dense<0.000000e+00> : vector<1x96xf32>
    %153 = tpu.matmul %152, %1, %cst_23 {dimension_numbers = #tpu.dot_dimension_numbers<[1], [0], [0], [1], [0, 0, 1, 1], [], []>} : vector<1x32xf32>, vector<32x96xf32>, vector<1x96xf32> -> vector<1x96xf32>
    %154 = arith.addf %153, %3 : vector<1x96xf32>
    %155 = vector.extract_strided_slice %10 {offsets = [7, 0], sizes = [1, 64], strides = [1, 1]} : vector<8x64xf32> to vector<1x64xf32>
    %156 = vector.extract_strided_slice %154 {offsets = [0, 0], sizes = [1, 64], strides = [1, 1]} : vector<1x96xf32> to vector<1x64xf32>
    %157 = arith.addf %155, %156 : vector<1x64xf32>
    %158 = arith.negf %157 : vector<1x64xf32>
    %159 = math.exp %158 : vector<1x64xf32>
    %cst_24 = arith.constant 1.000000e+00 : f32
    %160 = vector.broadcast %cst_24 : f32 to vector<1x64xf32>
    %161 = arith.addf %160, %159 : vector<1x64xf32>
    %162 = arith.divf %160, %161 : vector<1x64xf32>
    %163 = vector.extract_strided_slice %162 {offsets = [0, 0], sizes = [1, 32], strides = [1, 1]} : vector<1x64xf32> to vector<1x32xf32>
    %164 = vector.extract_strided_slice %162 {offsets = [0, 32], sizes = [1, 32], strides = [1, 1]} : vector<1x64xf32> to vector<1x32xf32>
    %165 = vector.extract_strided_slice %11 {offsets = [7, 0], sizes = [1, 32], strides = [1, 1]} : vector<8x32xf32> to vector<1x32xf32>
    %166 = vector.extract_strided_slice %154 {offsets = [0, 64], sizes = [1, 32], strides = [1, 1]} : vector<1x96xf32> to vector<1x32xf32>
    %167 = arith.mulf %163, %166 : vector<1x32xf32>
    %168 = arith.addf %165, %167 : vector<1x32xf32>
    %169 = math.tanh %168 : vector<1x32xf32>
    %170 = arith.subf %152, %169 : vector<1x32xf32>
    %171 = arith.mulf %164, %170 : vector<1x32xf32>
    %172 = arith.addf %169, %171 : vector<1x32xf32>
    %173 = tpu.concatenate %32, %52, %72, %92, %112, %132, %152, %172 in 0 : vector<1x32xf32>, vector<1x32xf32>, vector<1x32xf32>, vector<1x32xf32>, vector<1x32xf32>, vector<1x32xf32>, vector<1x32xf32>, vector<1x32xf32> -> vector<8x32xf32>
    %cst_25 = arith.constant dense<0.000000e+00> : vector<8x128xf32>
    %174 = tpu.matmul %173, %4, %cst_25 {dimension_numbers = #tpu.dot_dimension_numbers<[1], [0], [0], [1], [0, 0, 1, 1], [], []>} : vector<8x32xf32>, vector<32x128xf32>, vector<8x128xf32> -> vector<8x128xf32>
    %175 = vector.broadcast %5 : vector<1x128xf32> to vector<8x128xf32>
    %176 = arith.addf %174, %175 : vector<8x128xf32>
    %c0_26 = arith.constant 0 : index
    %c0_27 = arith.constant 0 : index
    %177 = vector.load %arg2[%c0_26, %c0_27] : memref<8x128xf32, #tpu.memory_space<vmem>>, vector<8x128xf32>
    tpu.vector_store %arg2[%c0_26, %c0_27], %176 {strides = array<i32>} : memref<8x128xf32, #tpu.memory_space<vmem>>, vector<8x128xf32>,
    return
  }
}

</mosaic_0001>

<llo_original>
// kernel: tpu_custom_call.1
$region0: #{tpu_custom_call.1}
  #allocation0 [shape = 'u32[]', space=smem, size = 0x4, offset = 0x4, fixed_abs, tag = 'smem constant byte address 0x4 - core index']
  #allocation1 [shape = 'u32[144,128]{1,0:T(1,128)}', space=vmem, size = 0x12000, scoped, tag = 'internal scratch']
  %s0 = inlined_call_operand.hbm [shape: f32[8,8], index: 0, kind: input, shape index: {}]
  %s1 = inlined_call_operand.hbm [shape: f32[96,128], index: 1, kind: input, shape index: {}]
  %s2 = inlined_call_operand.hbm [shape: f32[8,128], index: 2, kind: output, shape index: {}]
  %s3 = sld [smem:[#allocation0]]
  $region26: #{tpu_custom_call.1} parent=0
    _
  %s5 = ssub.s32 1, %s3
  %s6 = scalar_select 0, %s5, %s3
  $region1: #{tpu_custom_call.1} parent=0
    #allocation2 [shape = 'u8[4096]{0}', space=vmem, size = 0x1000, scoped, tag = 'input window, operand 0, single buffered']
    #allocation3 [shape = 's32[1]{0}', space=sflag, size = 0x4, scoped, tag = 'scoped memory for tpu_custom_call.1']
    #allocation4 [shape = 's32[1]{0}', space=sflag, size = 0x4, scoped, tag = 'scoped memory for tpu_custom_call.1']
    #allocation5 [shape = 'u8[49152]{0}', space=vmem, size = 0xc000, scoped, tag = 'input window, operand 1, single buffered']
    #allocation6 [shape = 's32[1]{0}', space=sflag, size = 0x4, scoped, tag = 'scoped memory for tpu_custom_call.1']
    #allocation7 [shape = 'u8[4096]{0}', space=vmem, size = 0x1000, scoped, tag = 'output window, operand 0, single buffered']
    %7 = vsyncpa [#allocation3], 0
    %8 = vsyncpa [#allocation6], 0
    %9 = vsyncpa [#allocation4], 0
    // Predicated region
    $region2: #{tpu_custom_call.1} parent=1 // pred_check
      _
    $region3: #{tpu_custom_call.1} parent=1 // pred_check_branch
      %11 = sbr.rel (0) target = $region5
    $region4: #{tpu_custom_call.1} parent=1 // pred_region
      %s13 = ssub.s32 128, 128
      %14 = vsyncadd [#allocation3], %s13
      %s16 = sshll.u32 [#allocation2], 4
      %s17 = int_to_ptr.vmem [resolvable:$true] %s16
      %19 = dma.hbm_to_vmem [thread:$0]  %s0, 128, %s17, [#allocation3]
    $region5: #{tpu_custom_call.1} parent=1 // pred_fallthru
      _
    // Predicated region
    $region6: #{tpu_custom_call.1} parent=1 // pred_check
      _
    $region7: #{tpu_custom_call.1} parent=1 // pred_check_branch
      %21 = sbr.rel (0) target = $region9
    $region8: #{tpu_custom_call.1} parent=1 // pred_region
      %s23 = ssub.s32 1536, 1536
      %24 = vsyncadd [#allocation6], %s23
      %s25 = sshll.u32 [#allocation5], 4
      %s26 = int_to_ptr.vmem [resolvable:$true] %s25
      %31 = dma.hbm_to_vmem [thread:$0]  %s1, 1536, %s26, [#allocation6], 128, 128, 8
    $region9: #{tpu_custom_call.1} parent=1 // pred_fallthru
      _
    // Predicated region
    $region10: #{tpu_custom_call.1} parent=1 // pred_check
      _
    $region11: #{tpu_custom_call.1} parent=1 // pred_check_branch
      %33 = sbr.rel (0) target = $region13
    $region12: #{tpu_custom_call.1} parent=1 // pred_region
      %34 = dma.done [#allocation3], 128
    $region13: #{tpu_custom_call.1} parent=1 // pred_fallthru
      _
    // Predicated region
    $region14: #{tpu_custom_call.1} parent=1 // pred_check
      _
    $region15: #{tpu_custom_call.1} parent=1 // pred_check_branch
      %36 = sbr.rel (0) target = $region17
    $region16: #{tpu_custom_call.1} parent=1 // pred_region
      %37 = dma.done [#allocation6], 1536
    $region17: #{tpu_custom_call.1} parent=1 // pred_fallthru
      _
    %v38 = vld [vmem:[#allocation5] sm:$0xff]
    %v39 = vld [vmem:[#allocation5 + $0x8] sm:$0xff]
    %v40 = vld [vmem:[#allocation5 + $0x10] sm:$0xff]
    %v41 = vld [vmem:[#allocation5 + $0x18] sm:$0xff]
    %v42 = vld [vmem:[#allocation5 + $0x20] sm:$0xff]
    %v43 = vld [vmem:[#allocation5 + $0x28] sm:$0x1]
    %v44 = vld [vmem:[#allocation5 + $0x30] sm:$0x1]
    %v45 = vld [vmem:[#allocation5 + $0x38] sm:$0xff]
    %v46 = vld [vmem:[#allocation5 + $0x40] sm:$0xff]
    %v47 = vld [vmem:[#allocation5 + $0x48] sm:$0xff]
    %v48 = vld [vmem:[#allocation5 + $0x50] sm:$0xff]
    %v49 = vld [vmem:[#allocation5 + $0x58] sm:$0x1]
    %v50 = vld [vmem:[#allocation2] sm:$0xff]
    %v51 = vlaneseq
    %v52 = vshrl.u32 %v51, 7
    %v53 = vsub.s32 0, %v52
    %v54 = vrot.slane %v43, %v53
    %vm55 = vcmask 64512
    %v57 = vsel %vm55, %v50, 0
    %59 = vmatprep.subr.mxu0 0.0
    %60 = vmatpush1.msra.mxu0 0.0
    %61 = vmatprep.subr.mxu0 0.0
    %62 = vmatpush1.msra.mxu0 0.0
    %63 = vmatprep.subr.mxu0 0.0
    %64 = vmatpush1.msra.mxu0 0.0
    %65 = vmatprep.subr.mxu0 0.0
    %66 = vmatpush1.msra.mxu0 0.0
    %67 = vmatprep.subr.mxu0 0.0
    %68 = vmatpush1.msra.mxu0 0.0
    %69 = vmatprep.subr.mxu0 0.0
    %70 = vmatpush1.msra.mxu0 0.0
    %71 = vmatprep.subr.mxu0 0.0
    %72 = vmatpush1.msra.mxu0 0.0
    %73 = vmatprep.subr.mxu0 0.0
    %74 = vmatpush1.msra.mxu0 0.0
    %75 = vmatprep.subr.mxu0 0.0
    %76 = vmatpush1.msra.mxu0 0.0
    %77 = vmatprep.subr.mxu0 0.0
    %78 = vmatpush1.msra.mxu0 0.0
    %79 = vmatprep.subr.mxu0 0.0
    %80 = vmatpush1.msra.mxu0 0.0
    %81 = vmatprep.subr.mxu0 0.0
    %82 = vmatpush1.msra.mxu0 0.0
    %83 = vmatprep.subr.mxu0 0.0
    %84 = vmatpush1.msra.mxu0 0.0
    %85 = vmatprep.subr.mxu0 0.0
    %86 = vmatpush1.msra.mxu0 0.0
    %87 = vmatprep.subr.mxu0 0.0
    %88 = vmatpush1.msra.mxu0 0.0
    %89 = vmatprep.subr.mxu0 0.0
    %90 = vmatpush1.msra.mxu0 %v38
    %91 = vmatprep.subr.mxu0 0.0
    %92 = vmatpush2.msra.mxu0 0.0
    %93 = vmatprep.subr.mxu0 0.0
    %94 = vmatpush2.msra.mxu0 0.0
    %95 = vmatprep.subr.mxu0 0.0
    %96 = vmatpush2.msra.mxu0 0.0
    %97 = vmatprep.subr.mxu0 0.0
    %98 = vmatpush2.msra.mxu0 0.0
    %99 = vmatprep.subr.mxu0 0.0
    %100 = vmatpush2.msra.mxu0 0.0
    %101 = vmatprep.subr.mxu0 0.0
    %102 = vmatpush2.msra.mxu0 0.0
    %103 = vmatprep.subr.mxu0 0.0
    %104 = vmatpush2.msra.mxu0 0.0
    %105 = vmatprep.subr.mxu0 0.0
    %106 = vmatpush2.msra.mxu0 0.0
    %107 = vmatprep.subr.mxu0 0.0
    %108 = vmatpush2.msra.mxu0 0.0
    %109 = vmatprep.subr.mxu0 0.0
    %110 = vmatpush2.msra.mxu0 0.0
    %111 = vmatprep.subr.mxu0 0.0
    %112 = vmatpush2.msra.mxu0 0.0
    %113 = vmatprep.subr.mxu0 0.0
    %114 = vmatpush2.msra.mxu0 0.0
    %115 = vmatprep.subr.mxu0 0.0
    %116 = vmatpush2.msra.mxu0 0.0
    %117 = vmatprep.subr.mxu0 0.0
    %118 = vmatpush2.msra.mxu0 0.0
    %119 = vmatprep.subr.mxu0 0.0
    %120 = vmatpush2.msra.mxu0 0.0
    %121 = vmatprep.subr.mxu0 0.0
    %122 = vmatpush2.msra.mxu0 0.0
    %123 = vmatprep.mubr.f32.mxu0 0.0
    %124 = vmatmul.mubr.f32.gmra.mxu0 %v57
    %v125 = vpop.f32.mrf.mxu0
    %v126 = vadd.f32 %v54, %v125
    %v127 = vpop.f32.mrf.mxu0
    %128 = vdwg.mxu0
    %vm129 = vcmask 261120
    %v131 = vsel %vm129, 0.0, 0
    %133 = vmatprep.subr.mxu0 0.0
    %134 = vmatpush1.msra.mxu0 0.0
    %135 = vmatprep.subr.mxu0 0.0
    %136 = vmatpush1.msra.mxu0 0.0
    %137 = vmatprep.subr.mxu0 0.0
    %138 = vmatpush1.msra.mxu0 0.0
    %139 = vmatprep.subr.mxu0 0.0
    %140 = vmatpush1.msra.mxu0 0.0
    %141 = vmatprep.subr.mxu0 0.0
    %142 = vmatpush1.msra.mxu0 0.0
    %143 = vmatprep.subr.mxu0 0.0
    %144 = vmatpush1.msra.mxu0 0.0
    %145 = vmatprep.subr.mxu0 0.0
    %146 = vmatpush1.msra.mxu0 0.0
    %147 = vmatprep.subr.mxu0 0.0
    %148 = vmatpush1.msra.mxu0 0.0
    %149 = vmatprep.subr.mxu0 0.0
    %150 = vmatpush1.msra.mxu0 0.0
    %151 = vmatprep.subr.mxu0 0.0
    %152 = vmatpush1.msra.mxu0 0.0
    %153 = vmatprep.subr.mxu0 0.0
    %154 = vmatpush1.msra.mxu0 0.0
    %155 = vmatprep.subr.mxu0 0.0
    %156 = vmatpush1.msra.mxu0 0.0
    %157 = vmatprep.subr.mxu0 0.0
    %158 = vmatpush1.msra.mxu0 %v42
    %159 = vmatprep.subr.mxu0 0.0
    %160 = vmatpush1.msra.mxu0 %v41
    %161 = vmatprep.subr.mxu0 0.0
    %162 = vmatpush1.msra.mxu0 %v40
    %163 = vmatprep.subr.mxu0 0.0
    %164 = vmatpush1.msra.mxu0 %v39
    %165 = vmatprep.subr.mxu0 0.0
    %166 = vmatpush2.msra.mxu0 0.0
    %167 = vmatprep.subr.mxu0 0.0
    %168 = vmatpush2.msra.mxu0 0.0
    %169 = vmatprep.subr.mxu0 0.0
    %170 = vmatpush2.msra.mxu0 0.0
    %171 = vmatprep.subr.mxu0 0.0
    %172 = vmatpush2.msra.mxu0 0.0
    %173 = vmatprep.subr.mxu0 0.0
    %174 = vmatpush2.msra.mxu0 0.0
    %175 = vmatprep.subr.mxu0 0.0
    %176 = vmatpush2.msra.mxu0 0.0
    %177 = vmatprep.subr.mxu0 0.0
    %178 = vmatpush2.msra.mxu0 0.0
    %179 = vmatprep.subr.mxu0 0.0
    %180 = vmatpush2.msra.mxu0 0.0
    %181 = vmatprep.subr.mxu0 0.0
    %182 = vmatpush2.msra.mxu0 0.0
    %183 = vmatprep.subr.mxu0 0.0
    %184 = vmatpush2.msra.mxu0 0.0
    %185 = vmatprep.subr.mxu0 0.0
    %186 = vmatpush2.msra.mxu0 0.0
    %187 = vmatprep.subr.mxu0 0.0
    %188 = vmatpush2.msra.mxu0 0.0
    %189 = vmatprep.subr.mxu0 0.0
    %190 = vmatpush2.msra.mxu0 0.0
    %191 = vmatprep.subr.mxu0 0.0
    %192 = vmatpush2.msra.mxu0 0.0
    %193 = vmatprep.subr.mxu0 0.0
    %194 = vmatpush2.msra.mxu0 0.0
    %195 = vmatprep.subr.mxu0 0.0
    %196 = vmatpush2.msra.mxu0 0.0
    %197 = vmatprep.mubr.f32.mxu0 0.0
    %198 = vmatmul.mubr.f32.gmra.mxu0 %v131
    %v199 = vpop.f32.mrf.mxu0
    %v200 = vadd.f32 %v44, %v199
    %v201 = vpop.f32.mrf.mxu0
    %202 = vdwg.mxu0
    %v203 = vadd.f32 %v126, %v200
    %v204 = vxor.u32 %v203, 2147483648
    %v205 = vmul.f32 %v204, 1.442695
    %v206 = vpow.pop %v205
    %v207 = vadd.f32 %v206, 1.0
    %v208 = vrcp.pop %v207
    %v209 = vmul.f32 1.0, %v208
    %211 = vrot.lane.b32.xlu0 %v200, 64
    %v212 = vpop.permute.xlu0 %211
    %v214 = vmul.f32 %v209, %v212
    %216 = vrot.lane.b32.xlu0 %v214, 64
    %v217 = vpop.permute.xlu0 %216
    %v219 = vadd.f32 %v126, %v217
    %v220 = vtanh.pop %v219
    %v221 = vsub.f32 0.0, %v220
    %223 = vrot.lane.b32.xlu0 %v221, 96
    %v224 = vpop.permute.xlu0 %223
    %v226 = vmul.f32 %v209, %v224
    %228 = vrot.lane.b32.xlu0 %v226, 32
    %v229 = vpop.permute.xlu0 %228
    %v231 = vadd.f32 %v220, %v229
    %233 = vrot.lane.b32.xlu0 %v231, 64
    %v234 = vpop.permute.xlu0 %233
    %v235 = vsel %vm129, %v234, 0
    %237 = vmatprep.subr.mxu0 0.0
    %238 = vmatpush1.msra.mxu0 0.0
    %239 = vmatprep.subr.mxu0 0.0
    %240 = vmatpush1.msra.mxu0 0.0
    %241 = vmatprep.subr.mxu0 0.0
    %242 = vmatpush1.msra.mxu0 0.0
    %243 = vmatprep.subr.mxu0 0.0
    %244 = vmatpush1.msra.mxu0 0.0
    %245 = vmatprep.subr.mxu0 0.0
    %246 = vmatpush1.msra.mxu0 0.0
    %247 = vmatprep.subr.mxu0 0.0
    %248 = vmatpush1.msra.mxu0 0.0
    %249 = vmatprep.subr.mxu0 0.0
    %250 = vmatpush1.msra.mxu0 0.0
    %251 = vmatprep.subr.mxu0 0.0
    %252 = vmatpush1.msra.mxu0 0.0
    %253 = vmatprep.subr.mxu0 0.0
    %254 = vmatpush1.msra.mxu0 0.0
    %255 = vmatprep.subr.mxu0 0.0
    %256 = vmatpush1.msra.mxu0 0.0
    %257 = vmatprep.subr.mxu0 0.0
    %258 = vmatpush1.msra.mxu0 0.0
    %259 = vmatprep.subr.mxu0 0.0
    %260 = vmatpush1.msra.mxu0 0.0
    %261 = vmatprep.subr.mxu0 0.0
    %262 = vmatpush1.msra.mxu0 %v42
    %263 = vmatprep.subr.mxu0 0.0
    %264 = vmatpush1.msra.mxu0 %v41
    %265 = vmatprep.subr.mxu0 0.0
    %266 = vmatpush1.msra.mxu0 %v40
    %267 = vmatprep.subr.mxu0 0.0
    %268 = vmatpush1.msra.mxu0 %v39
    %269 = vmatprep.subr.mxu0 0.0
    %270 = vmatpush2.msra.mxu0 0.0
    %271 = vmatprep.subr.mxu0 0.0
    %272 = vmatpush2.msra.mxu0 0.0
    %273 = vmatprep.subr.mxu0 0.0
    %274 = vmatpush2.msra.mxu0 0.0
    %275 = vmatprep.subr.mxu0 0.0
    %276 = vmatpush2.msra.mxu0 0.0
    %277 = vmatprep.subr.mxu0 0.0
    %278 = vmatpush2.msra.mxu0 0.0
    %279 = vmatprep.subr.mxu0 0.0
    %280 = vmatpush2.msra.mxu0 0.0
    %281 = vmatprep.subr.mxu0 0.0
    %282 = vmatpush2.msra.mxu0 0.0
    %283 = vmatprep.subr.mxu0 0.0
    %284 = vmatpush2.msra.mxu0 0.0
    %285 = vmatprep.subr.mxu0 0.0
    %286 = vmatpush2.msra.mxu0 0.0
    %287 = vmatprep.subr.mxu0 0.0
    %288 = vmatpush2.msra.mxu0 0.0
    %289 = vmatprep.subr.mxu0 0.0
    %290 = vmatpush2.msra.mxu0 0.0
    %291 = vmatprep.subr.mxu0 0.0
    %292 = vmatpush2.msra.mxu0 0.0
    %293 = vmatprep.subr.mxu0 0.0
    %294 = vmatpush2.msra.mxu0 0.0
    %295 = vmatprep.subr.mxu0 0.0
    %296 = vmatpush2.msra.mxu0 0.0
    %297 = vmatprep.subr.mxu0 0.0
    %298 = vmatpush2.msra.mxu0 0.0
    %299 = vmatprep.subr.mxu0 0.0
    %300 = vmatpush2.msra.mxu0 0.0
    %301 = vmatprep.mubr.f32.mxu0 0.0
    %302 = vmatmul.mubr.f32.gmra.mxu0 %v235
    %v303 = vpop.f32.mrf.mxu0
    %v304 = vadd.f32 %v44, %v303
    %v305 = vpop.f32.mrf.mxu0
    %306 = vdwg.mxu0
    %v308 = vrot.slane %v304, 7
    %v310 = vadd.f32 %v126, %v308
    %v311 = vxor.u32 %v310, 2147483648
    %v312 = vmul.f32 %v311, 1.442695
    %v313 = vpow.pop %v312
    %v314 = vadd.f32 %v313, 1.0
    %v315 = vrcp.pop %v314
    %v316 = vmul.f32 1.0, %v315
    %317 = vrot.lane.b32.xlu0 %v308, 64
    %v318 = vpop.permute.xlu0 %317
    %v320 = vmul.f32 %v316, %v318
    %322 = vrot.lane.b32.xlu0 %v320, 64
    %v323 = vpop.permute.xlu0 %322
    %v325 = vadd.f32 %v126, %v323
    %v326 = vtanh.pop %v325
    %v328 = vrot.slane %v326, 1
    %v330 = vsub.f32 %v231, %v328
    %v332 = vrot.slane %v330, 7
    %333 = vrot.lane.b32.xlu0 %v332, 96
    %v334 = vpop.permute.xlu0 %333
    %v336 = vmul.f32 %v316, %v334
    %338 = vrot.lane.b32.xlu0 %v336, 32
    %v339 = vpop.permute.xlu0 %338
    %v341 = vadd.f32 %v326, %v339
    %v343 = vrot.slane %v341, 1
    %344 = vrot.lane.b32.xlu0 %v343, 64
    %v345 = vpop.permute.xlu0 %344
    %v346 = vsel %vm129, %v345, 0
    %348 = vmatprep.subr.mxu0 0.0
    %349 = vmatpush1.msra.mxu0 0.0
    %350 = vmatprep.subr.mxu0 0.0
    %351 = vmatpush1.msra.mxu0 0.0
    %352 = vmatprep.subr.mxu0 0.0
    %353 = vmatpush1.msra.mxu0 0.0
    %354 = vmatprep.subr.mxu0 0.0
    %355 = vmatpush1.msra.mxu0 0.0
    %356 = vmatprep.subr.mxu0 0.0
    %357 = vmatpush1.msra.mxu0 0.0
    %358 = vmatprep.subr.mxu0 0.0
    %359 = vmatpush1.msra.mxu0 0.0
    %360 = vmatprep.subr.mxu0 0.0
    %361 = vmatpush1.msra.mxu0 0.0
    %362 = vmatprep.subr.mxu0 0.0
    %363 = vmatpush1.msra.mxu0 0.0
    %364 = vmatprep.subr.mxu0 0.0
    %365 = vmatpush1.msra.mxu0 0.0
    %366 = vmatprep.subr.mxu0 0.0
    %367 = vmatpush1.msra.mxu0 0.0
    %368 = vmatprep.subr.mxu0 0.0
    %369 = vmatpush1.msra.mxu0 0.0
    %370 = vmatprep.subr.mxu0 0.0
    %371 = vmatpush1.msra.mxu0 0.0
    %372 = vmatprep.subr.mxu0 0.0
    %373 = vmatpush1.msra.mxu0 %v42
    %374 = vmatprep.subr.mxu0 0.0
    %375 = vmatpush1.msra.mxu0 %v41
    %376 = vmatprep.subr.mxu0 0.0
    %377 = vmatpush1.msra.mxu0 %v40
    %378 = vmatprep.subr.mxu0 0.0
    %379 = vmatpush1.msra.mxu0 %v39
    %380 = vmatprep.subr.mxu0 0.0
    %381 = vmatpush2.msra.mxu0 0.0
    %382 = vmatprep.subr.mxu0 0.0
    %383 = vmatpush2.msra.mxu0 0.0
    %384 = vmatprep.subr.mxu0 0.0
    %385 = vmatpush2.msra.mxu0 0.0
    %386 = vmatprep.subr.mxu0 0.0
    %387 = vmatpush2.msra.mxu0 0.0
    %388 = vmatprep.subr.mxu0 0.0
    %389 = vmatpush2.msra.mxu0 0.0
    %390 = vmatprep.subr.mxu0 0.0
    %391 = vmatpush2.msra.mxu0 0.0
    %392 = vmatprep.subr.mxu0 0.0
    %393 = vmatpush2.msra.mxu0 0.0
    %394 = vmatprep.subr.mxu0 0.0
    %395 = vmatpush2.msra.mxu0 0.0
    %396 = vmatprep.subr.mxu0 0.0
    %397 = vmatpush2.msra.mxu0 0.0
    %398 = vmatprep.subr.mxu0 0.0
    %399 = vmatpush2.msra.mxu0 0.0
    %400 = vmatprep.subr.mxu0 0.0
    %401 = vmatpush2.msra.mxu0 0.0
    %402 = vmatprep.subr.mxu0 0.0
    %403 = vmatpush2.msra.mxu0 0.0
    %404 = vmatprep.subr.mxu0 0.0
    %405 = vmatpush2.msra.mxu0 0.0
    %406 = vmatprep.subr.mxu0 0.0
    %407 = vmatpush2.msra.mxu0 0.0
    %408 = vmatprep.subr.mxu0 0.0
    %409 = vmatpush2.msra.mxu0 0.0
    %410 = vmatprep.subr.mxu0 0.0
    %411 = vmatpush2.msra.mxu0 0.0
    %412 = vmatprep.mubr.f32.mxu0 0.0
    %413 = vmatmul.mubr.f32.gmra.mxu0 %v346
    %v414 = vpop.f32.mrf.mxu0
    %v415 = vadd.f32 %v44, %v414
    %v416 = vpop.f32.mrf.mxu0
    %417 = vdwg.mxu0
    %v419 = vrot.slane %v415, 6
    %v421 = vadd.f32 %v126, %v419
    %v422 = vxor.u32 %v421, 2147483648
    %v423 = vmul.f32 %v422, 1.442695
    %v424 = vpow.pop %v423
    %v425 = vadd.f32 %v424, 1.0
    %v426 = vrcp.pop %v425
    %v427 = vmul.f32 1.0, %v426
    %428 = vrot.lane.b32.xlu0 %v419, 64
    %v429 = vpop.permute.xlu0 %428
    %v431 = vmul.f32 %v427, %v429
    %433 = vrot.lane.b32.xlu0 %v431, 64
    %v434 = vpop.permute.xlu0 %433
    %v436 = vadd.f32 %v126, %v434
    %v437 = vtanh.pop %v436
    %v439 = vrot.slane %v437, 1
    %v441 = vsub.f32 %v341, %v439
    %v443 = vrot.slane %v441, 7
    %444 = vrot.lane.b32.xlu0 %v443, 96
    %v445 = vpop.permute.xlu0 %444
    %v447 = vmul.f32 %v427, %v445
    %449 = vrot.lane.b32.xlu0 %v447, 32
    %v450 = vpop.permute.xlu0 %449
    %v452 = vadd.f32 %v437, %v450
    %v454 = vrot.slane %v452, 2
    %455 = vrot.lane.b32.xlu0 %v454, 64
    %v456 = vpop.permute.xlu0 %455
    %v457 = vsel %vm129, %v456, 0
    %459 = vmatprep.subr.mxu0 0.0
    %460 = vmatpush1.msra.mxu0 0.0
    %461 = vmatprep.subr.mxu0 0.0
    %462 = vmatpush1.msra.mxu0 0.0
    %463 = vmatprep.subr.mxu0 0.0
    %464 = vmatpush1.msra.mxu0 0.0
    %465 = vmatprep.subr.mxu0 0.0
    %466 = vmatpush1.msra.mxu0 0.0
    %467 = vmatprep.subr.mxu0 0.0
    %468 = vmatpush1.msra.mxu0 0.0
    %469 = vmatprep.subr.mxu0 0.0
    %470 = vmatpush1.msra.mxu0 0.0
    %471 = vmatprep.subr.mxu0 0.0
    %472 = vmatpush1.msra.mxu0 0.0
    %473 = vmatprep.subr.mxu0 0.0
    %474 = vmatpush1.msra.mxu0 0.0
    %475 = vmatprep.subr.mxu0 0.0
    %476 = vmatpush1.msra.mxu0 0.0
    %477 = vmatprep.subr.mxu0 0.0
    %478 = vmatpush1.msra.mxu0 0.0
    %479 = vmatprep.subr.mxu0 0.0
    %480 = vmatpush1.msra.mxu0 0.0
    %481 = vmatprep.subr.mxu0 0.0
    %482 = vmatpush1.msra.mxu0 0.0
    %483 = vmatprep.subr.mxu0 0.0
    %484 = vmatpush1.msra.mxu0 %v42
    %485 = vmatprep.subr.mxu0 0.0
    %486 = vmatpush1.msra.mxu0 %v41
    %487 = vmatprep.subr.mxu0 0.0
    %488 = vmatpush1.msra.mxu0 %v40
    %489 = vmatprep.subr.mxu0 0.0
    %490 = vmatpush1.msra.mxu0 %v39
    %491 = vmatprep.subr.mxu0 0.0
    %492 = vmatpush2.msra.mxu0 0.0
    %493 = vmatprep.subr.mxu0 0.0
    %494 = vmatpush2.msra.mxu0 0.0
    %495 = vmatprep.subr.mxu0 0.0
    %496 = vmatpush2.msra.mxu0 0.0
    %497 = vmatprep.subr.mxu0 0.0
    %498 = vmatpush2.msra.mxu0 0.0
    %499 = vmatprep.subr.mxu0 0.0
    %500 = vmatpush2.msra.mxu0 0.0
    %501 = vmatprep.subr.mxu0 0.0
    %502 = vmatpush2.msra.mxu0 0.0
    %503 = vmatprep.subr.mxu0 0.0
    %504 = vmatpush2.msra.mxu0 0.0
    %505 = vmatprep.subr.mxu0 0.0
    %506 = vmatpush2.msra.mxu0 0.0
    %507 = vmatprep.subr.mxu0 0.0
    %508 = vmatpush2.msra.mxu0 0.0
    %509 = vmatprep.subr.mxu0 0.0
    %510 = vmatpush2.msra.mxu0 0.0
    %511 = vmatprep.subr.mxu0 0.0
    %512 = vmatpush2.msra.mxu0 0.0
    %513 = vmatprep.subr.mxu0 0.0
    %514 = vmatpush2.msra.mxu0 0.0
    %515 = vmatprep.subr.mxu0 0.0
    %516 = vmatpush2.msra.mxu0 0.0
    %517 = vmatprep.subr.mxu0 0.0
    %518 = vmatpush2.msra.mxu0 0.0
    %519 = vmatprep.subr.mxu0 0.0
    %520 = vmatpush2.msra.mxu0 0.0
    %521 = vmatprep.subr.mxu0 0.0
    %522 = vmatpush2.msra.mxu0 0.0
    %523 = vmatprep.mubr.f32.mxu0 0.0
    %524 = vmatmul.mubr.f32.gmra.mxu0 %v457
    %v525 = vpop.f32.mrf.mxu0
    %v526 = vadd.f32 %v44, %v525
    %v527 = vpop.f32.mrf.mxu0
    %528 = vdwg.mxu0
    %v530 = vrot.slane %v526, 5
    %v532 = vadd.f32 %v126, %v530
    %v533 = vxor.u32 %v532, 2147483648
    %v534 = vmul.f32 %v533, 1.442695
    %v535 = vpow.pop %v534
    %v536 = vadd.f32 %v535, 1.0
    %v537 = vrcp.pop %v536
    %v538 = vmul.f32 1.0, %v537
    %539 = vrot.lane.b32.xlu0 %v530, 64
    %v540 = vpop.permute.xlu0 %539
    %v542 = vmul.f32 %v538, %v540
    %544 = vrot.lane.b32.xlu0 %v542, 64
    %v545 = vpop.permute.xlu0 %544
    %v547 = vadd.f32 %v126, %v545
    %v548 = vtanh.pop %v547
    %v550 = vrot.slane %v548, 1
    %v552 = vsub.f32 %v452, %v550
    %v554 = vrot.slane %v552, 7
    %555 = vrot.lane.b32.xlu0 %v554, 96
    %v556 = vpop.permute.xlu0 %555
    %v558 = vmul.f32 %v538, %v556
    %560 = vrot.lane.b32.xlu0 %v558, 32
    %v561 = vpop.permute.xlu0 %560
    %v563 = vadd.f32 %v548, %v561
    %v565 = vrot.slane %v563, 3
    %566 = vrot.lane.b32.xlu0 %v565, 64
    %v567 = vpop.permute.xlu0 %566
    %v568 = vsel %vm129, %v567, 0
    %570 = vmatprep.subr.mxu0 0.0
    %571 = vmatpush1.msra.mxu0 0.0
    %572 = vmatprep.subr.mxu0 0.0
    %573 = vmatpush1.msra.mxu0 0.0
    %574 = vmatprep.subr.mxu0 0.0
    %575 = vmatpush1.msra.mxu0 0.0
    %576 = vmatprep.subr.mxu0 0.0
    %577 = vmatpush1.msra.mxu0 0.0
    %578 = vmatprep.subr.mxu0 0.0
    %579 = vmatpush1.msra.mxu0 0.0
    %580 = vmatprep.subr.mxu0 0.0
    %581 = vmatpush1.msra.mxu0 0.0
    %582 = vmatprep.subr.mxu0 0.0
    %583 = vmatpush1.msra.mxu0 0.0
    %584 = vmatprep.subr.mxu0 0.0
    %585 = vmatpush1.msra.mxu0 0.0
    %586 = vmatprep.subr.mxu0 0.0
    %587 = vmatpush1.msra.mxu0 0.0
    %588 = vmatprep.subr.mxu0 0.0
    %589 = vmatpush1.msra.mxu0 0.0
    %590 = vmatprep.subr.mxu0 0.0
    %591 = vmatpush1.msra.mxu0 0.0
    %592 = vmatprep.subr.mxu0 0.0
    %593 = vmatpush1.msra.mxu0 0.0
    %594 = vmatprep.subr.mxu0 0.0
    %595 = vmatpush1.msra.mxu0 %v42
    %596 = vmatprep.subr.mxu0 0.0
    %597 = vmatpush1.msra.mxu0 %v41
    %598 = vmatprep.subr.mxu0 0.0
    %599 = vmatpush1.msra.mxu0 %v40
    %600 = vmatprep.subr.mxu0 0.0
    %601 = vmatpush1.msra.mxu0 %v39
    %602 = vmatprep.subr.mxu0 0.0
    %603 = vmatpush2.msra.mxu0 0.0
    %604 = vmatprep.subr.mxu0 0.0
    %605 = vmatpush2.msra.mxu0 0.0
    %606 = vmatprep.subr.mxu0 0.0
    %607 = vmatpush2.msra.mxu0 0.0
    %608 = vmatprep.subr.mxu0 0.0
    %609 = vmatpush2.msra.mxu0 0.0
    %610 = vmatprep.subr.mxu0 0.0
    %611 = vmatpush2.msra.mxu0 0.0
    %612 = vmatprep.subr.mxu0 0.0
    %613 = vmatpush2.msra.mxu0 0.0
    %614 = vmatprep.subr.mxu0 0.0
    %615 = vmatpush2.msra.mxu0 0.0
    %616 = vmatprep.subr.mxu0 0.0
    %617 = vmatpush2.msra.mxu0 0.0
    %618 = vmatprep.subr.mxu0 0.0
    %619 = vmatpush2.msra.mxu0 0.0
    %620 = vmatprep.subr.mxu0 0.0
    %621 = vmatpush2.msra.mxu0 0.0
    %622 = vmatprep.subr.mxu0 0.0
    %623 = vmatpush2.msra.mxu0 0.0
    %624 = vmatprep.subr.mxu0 0.0
    %625 = vmatpush2.msra.mxu0 0.0
    %626 = vmatprep.subr.mxu0 0.0
    %627 = vmatpush2.msra.mxu0 0.0
    %628 = vmatprep.subr.mxu0 0.0
    %629 = vmatpush2.msra.mxu0 0.0
    %630 = vmatprep.subr.mxu0 0.0
    %631 = vmatpush2.msra.mxu0 0.0
    %632 = vmatprep.subr.mxu0 0.0
    %633 = vmatpush2.msra.mxu0 0.0
    %634 = vmatprep.mubr.f32.mxu0 0.0
    %635 = vmatmul.mubr.f32.gmra.mxu0 %v568
    %v636 = vpop.f32.mrf.mxu0
    %v637 = vadd.f32 %v44, %v636
    %v638 = vpop.f32.mrf.mxu0
    %639 = vdwg.mxu0
    %v641 = vrot.slane %v637, 4
    %v643 = vadd.f32 %v126, %v641
    %v644 = vxor.u32 %v643, 2147483648
    %v645 = vmul.f32 %v644, 1.442695
    %v646 = vpow.pop %v645
    %v647 = vadd.f32 %v646, 1.0
    %v648 = vrcp.pop %v647
    %v649 = vmul.f32 1.0, %v648
    %650 = vrot.lane.b32.xlu0 %v641, 64
    %v651 = vpop.permute.xlu0 %650
    %v653 = vmul.f32 %v649, %v651
    %655 = vrot.lane.b32.xlu0 %v653, 64
    %v656 = vpop.permute.xlu0 %655
    %v658 = vadd.f32 %v126, %v656
    %v659 = vtanh.pop %v658
    %v661 = vrot.slane %v659, 1
    %v663 = vsub.f32 %v563, %v661
    %v665 = vrot.slane %v663, 7
    %666 = vrot.lane.b32.xlu0 %v665, 96
    %v667 = vpop.permute.xlu0 %666
    %v669 = vmul.f32 %v649, %v667
    %671 = vrot.lane.b32.xlu0 %v669, 32
    %v672 = vpop.permute.xlu0 %671
    %v674 = vadd.f32 %v659, %v672
    %v676 = vrot.slane %v674, 4
    %677 = vrot.lane.b32.xlu0 %v676, 64
    %v678 = vpop.permute.xlu0 %677
    %v679 = vsel %vm129, %v678, 0
    %681 = vmatprep.subr.mxu0 0.0
    %682 = vmatpush1.msra.mxu0 0.0
    %683 = vmatprep.subr.mxu0 0.0
    %684 = vmatpush1.msra.mxu0 0.0
    %685 = vmatprep.subr.mxu0 0.0
    %686 = vmatpush1.msra.mxu0 0.0
    %687 = vmatprep.subr.mxu0 0.0
    %688 = vmatpush1.msra.mxu0 0.0
    %689 = vmatprep.subr.mxu0 0.0
    %690 = vmatpush1.msra.mxu0 0.0
    %691 = vmatprep.subr.mxu0 0.0
    %692 = vmatpush1.msra.mxu0 0.0
    %693 = vmatprep.subr.mxu0 0.0
    %694 = vmatpush1.msra.mxu0 0.0
    %695 = vmatprep.subr.mxu0 0.0
    %696 = vmatpush1.msra.mxu0 0.0
    %697 = vmatprep.subr.mxu0 0.0
    %698 = vmatpush1.msra.mxu0 0.0
    %699 = vmatprep.subr.mxu0 0.0
    %700 = vmatpush1.msra.mxu0 0.0
    %701 = vmatprep.subr.mxu0 0.0
    %702 = vmatpush1.msra.mxu0 0.0
    %703 = vmatprep.subr.mxu0 0.0
    %704 = vmatpush1.msra.mxu0 0.0
    %705 = vmatprep.subr.mxu0 0.0
    %706 = vmatpush1.msra.mxu0 %v42
    %707 = vmatprep.subr.mxu0 0.0
    %708 = vmatpush1.msra.mxu0 %v41
    %709 = vmatprep.subr.mxu0 0.0
    %710 = vmatpush1.msra.mxu0 %v40
    %711 = vmatprep.subr.mxu0 0.0
    %712 = vmatpush1.msra.mxu0 %v39
    %713 = vmatprep.subr.mxu0 0.0
    %714 = vmatpush2.msra.mxu0 0.0
    %715 = vmatprep.subr.mxu0 0.0
    %716 = vmatpush2.msra.mxu0 0.0
    %717 = vmatprep.subr.mxu0 0.0
    %718 = vmatpush2.msra.mxu0 0.0
    %719 = vmatprep.subr.mxu0 0.0
    %720 = vmatpush2.msra.mxu0 0.0
    %721 = vmatprep.subr.mxu0 0.0
    %722 = vmatpush2.msra.mxu0 0.0
    %723 = vmatprep.subr.mxu0 0.0
    %724 = vmatpush2.msra.mxu0 0.0
    %725 = vmatprep.subr.mxu0 0.0
    %726 = vmatpush2.msra.mxu0 0.0
    %727 = vmatprep.subr.mxu0 0.0
    %728 = vmatpush2.msra.mxu0 0.0
    %729 = vmatprep.subr.mxu0 0.0
    %730 = vmatpush2.msra.mxu0 0.0
    %731 = vmatprep.subr.mxu0 0.0
    %732 = vmatpush2.msra.mxu0 0.0
    %733 = vmatprep.subr.mxu0 0.0
    %734 = vmatpush2.msra.mxu0 0.0
    %735 = vmatprep.subr.mxu0 0.0
    %736 = vmatpush2.msra.mxu0 0.0
    %737 = vmatprep.subr.mxu0 0.0
    %738 = vmatpush2.msra.mxu0 0.0
    %739 = vmatprep.subr.mxu0 0.0
    %740 = vmatpush2.msra.mxu0 0.0
    %741 = vmatprep.subr.mxu0 0.0
    %742 = vmatpush2.msra.mxu0 0.0
    %743 = vmatprep.subr.mxu0 0.0
    %744 = vmatpush2.msra.mxu0 0.0
    %745 = vmatprep.mubr.f32.mxu0 0.0
    %746 = vmatmul.mubr.f32.gmra.mxu0 %v679
    %v747 = vpop.f32.mrf.mxu0
    %v748 = vadd.f32 %v44, %v747
    %v749 = vpop.f32.mrf.mxu0
    %750 = vdwg.mxu0
    %v752 = vrot.slane %v748, 3
    %v754 = vadd.f32 %v126, %v752
    %v755 = vxor.u32 %v754, 2147483648
    %v756 = vmul.f32 %v755, 1.442695
    %v757 = vpow.pop %v756
    %v758 = vadd.f32 %v757, 1.0
    %v759 = vrcp.pop %v758
    %v760 = vmul.f32 1.0, %v759
    %761 = vrot.lane.b32.xlu0 %v752, 64
    %v762 = vpop.permute.xlu0 %761
    %v764 = vmul.f32 %v760, %v762
    %766 = vrot.lane.b32.xlu0 %v764, 64
    %v767 = vpop.permute.xlu0 %766
    %v769 = vadd.f32 %v126, %v767
    %v770 = vtanh.pop %v769
    %v772 = vrot.slane %v770, 1
    %v774 = vsub.f32 %v674, %v772
    %v776 = vrot.slane %v774, 7
    %777 = vrot.lane.b32.xlu0 %v776, 96
    %v778 = vpop.permute.xlu0 %777
    %v780 = vmul.f32 %v760, %v778
    %782 = vrot.lane.b32.xlu0 %v780, 32
    %v783 = vpop.permute.xlu0 %782
    %v785 = vadd.f32 %v770, %v783
    %v787 = vrot.slane %v785, 5
    %788 = vrot.lane.b32.xlu0 %v787, 64
    %v789 = vpop.permute.xlu0 %788
    %v790 = vsel %vm129, %v789, 0
    %792 = vmatprep.subr.mxu0 0.0
    %793 = vmatpush1.msra.mxu0 0.0
    %794 = vmatprep.subr.mxu0 0.0
    %795 = vmatpush1.msra.mxu0 0.0
    %796 = vmatprep.subr.mxu0 0.0
    %797 = vmatpush1.msra.mxu0 0.0
    %798 = vmatprep.subr.mxu0 0.0
    %799 = vmatpush1.msra.mxu0 0.0
    %800 = vmatprep.subr.mxu0 0.0
    %801 = vmatpush1.msra.mxu0 0.0
    %802 = vmatprep.subr.mxu0 0.0
    %803 = vmatpush1.msra.mxu0 0.0
    %804 = vmatprep.subr.mxu0 0.0
    %805 = vmatpush1.msra.mxu0 0.0
    %806 = vmatprep.subr.mxu0 0.0
    %807 = vmatpush1.msra.mxu0 0.0
    %808 = vmatprep.subr.mxu0 0.0
    %809 = vmatpush1.msra.mxu0 0.0
    %810 = vmatprep.subr.mxu0 0.0
    %811 = vmatpush1.msra.mxu0 0.0
    %812 = vmatprep.subr.mxu0 0.0
    %813 = vmatpush1.msra.mxu0 0.0
    %814 = vmatprep.subr.mxu0 0.0
    %815 = vmatpush1.msra.mxu0 0.0
    %816 = vmatprep.subr.mxu0 0.0
    %817 = vmatpush1.msra.mxu0 %v42
    %818 = vmatprep.subr.mxu0 0.0
    %819 = vmatpush1.msra.mxu0 %v41
    %820 = vmatprep.subr.mxu0 0.0
    %821 = vmatpush1.msra.mxu0 %v40
    %822 = vmatprep.subr.mxu0 0.0
    %823 = vmatpush1.msra.mxu0 %v39
    %824 = vmatprep.subr.mxu0 0.0
    %825 = vmatpush2.msra.mxu0 0.0
    %826 = vmatprep.subr.mxu0 0.0
    %827 = vmatpush2.msra.mxu0 0.0
    %828 = vmatprep.subr.mxu0 0.0
    %829 = vmatpush2.msra.mxu0 0.0
    %830 = vmatprep.subr.mxu0 0.0
    %831 = vmatpush2.msra.mxu0 0.0
    %832 = vmatprep.subr.mxu0 0.0
    %833 = vmatpush2.msra.mxu0 0.0
    %834 = vmatprep.subr.mxu0 0.0
    %835 = vmatpush2.msra.mxu0 0.0
    %836 = vmatprep.subr.mxu0 0.0
    %837 = vmatpush2.msra.mxu0 0.0
    %838 = vmatprep.subr.mxu0 0.0
    %839 = vmatpush2.msra.mxu0 0.0
    %840 = vmatprep.subr.mxu0 0.0
    %841 = vmatpush2.msra.mxu0 0.0
    %842 = vmatprep.subr.mxu0 0.0
    %843 = vmatpush2.msra.mxu0 0.0
    %844 = vmatprep.subr.mxu0 0.0
    %845 = vmatpush2.msra.mxu0 0.0
    %846 = vmatprep.subr.mxu0 0.0
    %847 = vmatpush2.msra.mxu0 0.0
    %848 = vmatprep.subr.mxu0 0.0
    %849 = vmatpush2.msra.mxu0 0.0
    %850 = vmatprep.subr.mxu0 0.0
    %851 = vmatpush2.msra.mxu0 0.0
    %852 = vmatprep.subr.mxu0 0.0
    %853 = vmatpush2.msra.mxu0 0.0
    %854 = vmatprep.subr.mxu0 0.0
    %855 = vmatpush2.msra.mxu0 0.0
    %856 = vmatprep.mubr.f32.mxu0 0.0
    %857 = vmatmul.mubr.f32.gmra.mxu0 %v790
    %v858 = vpop.f32.mrf.mxu0
    %v859 = vadd.f32 %v44, %v858
    %v860 = vpop.f32.mrf.mxu0
    %861 = vdwg.mxu0
    %v863 = vrot.slane %v859, 2
    %v865 = vadd.f32 %v126, %v863
    %v866 = vxor.u32 %v865, 2147483648
    %v867 = vmul.f32 %v866, 1.442695
    %v868 = vpow.pop %v867
    %v869 = vadd.f32 %v868, 1.0
    %v870 = vrcp.pop %v869
    %v871 = vmul.f32 1.0, %v870
    %872 = vrot.lane.b32.xlu0 %v863, 64
    %v873 = vpop.permute.xlu0 %872
    %v875 = vmul.f32 %v871, %v873
    %877 = vrot.lane.b32.xlu0 %v875, 64
    %v878 = vpop.permute.xlu0 %877
    %v880 = vadd.f32 %v126, %v878
    %v881 = vtanh.pop %v880
    %v883 = vrot.slane %v881, 1
    %v885 = vsub.f32 %v785, %v883
    %v887 = vrot.slane %v885, 7
    %888 = vrot.lane.b32.xlu0 %v887, 96
    %v889 = vpop.permute.xlu0 %888
    %v891 = vmul.f32 %v871, %v889
    %893 = vrot.lane.b32.xlu0 %v891, 32
    %v894 = vpop.permute.xlu0 %893
    %v896 = vadd.f32 %v881, %v894
    %v898 = vrot.slane %v896, 6
    %899 = vrot.lane.b32.xlu0 %v898, 64
    %v900 = vpop.permute.xlu0 %899
    %v901 = vsel %vm129, %v900, 0
    %903 = vmatprep.subr.mxu0 0.0
    %904 = vmatpush1.msra.mxu0 0.0
    %905 = vmatprep.subr.mxu0 0.0
    %906 = vmatpush1.msra.mxu0 0.0
    %907 = vmatprep.subr.mxu0 0.0
    %908 = vmatpush1.msra.mxu0 0.0
    %909 = vmatprep.subr.mxu0 0.0
    %910 = vmatpush1.msra.mxu0 0.0
    %911 = vmatprep.subr.mxu0 0.0
    %912 = vmatpush1.msra.mxu0 0.0
    %913 = vmatprep.subr.mxu0 0.0
    %914 = vmatpush1.msra.mxu0 0.0
    %915 = vmatprep.subr.mxu0 0.0
    %916 = vmatpush1.msra.mxu0 0.0
    %917 = vmatprep.subr.mxu0 0.0
    %918 = vmatpush1.msra.mxu0 0.0
    %919 = vmatprep.subr.mxu0 0.0
    %920 = vmatpush1.msra.mxu0 0.0
    %921 = vmatprep.subr.mxu0 0.0
    %922 = vmatpush1.msra.mxu0 0.0
    %923 = vmatprep.subr.mxu0 0.0
    %924 = vmatpush1.msra.mxu0 0.0
    %925 = vmatprep.subr.mxu0 0.0
    %926 = vmatpush1.msra.mxu0 0.0
    %927 = vmatprep.subr.mxu0 0.0
    %928 = vmatpush1.msra.mxu0 %v42
    %929 = vmatprep.subr.mxu0 0.0
    %930 = vmatpush1.msra.mxu0 %v41
    %931 = vmatprep.subr.mxu0 0.0
    %932 = vmatpush1.msra.mxu0 %v40
    %933 = vmatprep.subr.mxu0 0.0
    %934 = vmatpush1.msra.mxu0 %v39
    %935 = vmatprep.subr.mxu0 0.0
    %936 = vmatpush2.msra.mxu0 0.0
    %937 = vmatprep.subr.mxu0 0.0
    %938 = vmatpush2.msra.mxu0 0.0
    %939 = vmatprep.subr.mxu0 0.0
    %940 = vmatpush2.msra.mxu0 0.0
    %941 = vmatprep.subr.mxu0 0.0
    %942 = vmatpush2.msra.mxu0 0.0
    %943 = vmatprep.subr.mxu0 0.0
    %944 = vmatpush2.msra.mxu0 0.0
    %945 = vmatprep.subr.mxu0 0.0
    %946 = vmatpush2.msra.mxu0 0.0
    %947 = vmatprep.subr.mxu0 0.0
    %948 = vmatpush2.msra.mxu0 0.0
    %949 = vmatprep.subr.mxu0 0.0
    %950 = vmatpush2.msra.mxu0 0.0
    %951 = vmatprep.subr.mxu0 0.0
    %952 = vmatpush2.msra.mxu0 0.0
    %953 = vmatprep.subr.mxu0 0.0
    %954 = vmatpush2.msra.mxu0 0.0
    %955 = vmatprep.subr.mxu0 0.0
    %956 = vmatpush2.msra.mxu0 0.0
    %957 = vmatprep.subr.mxu0 0.0
    %958 = vmatpush2.msra.mxu0 0.0
    %959 = vmatprep.subr.mxu0 0.0
    %960 = vmatpush2.msra.mxu0 0.0
    %961 = vmatprep.subr.mxu0 0.0
    %962 = vmatpush2.msra.mxu0 0.0
    %963 = vmatprep.subr.mxu0 0.0
    %964 = vmatpush2.msra.mxu0 0.0
    %965 = vmatprep.subr.mxu0 0.0
    %966 = vmatpush2.msra.mxu0 0.0
    %967 = vmatprep.mubr.f32.mxu0 0.0
    %968 = vmatmul.mubr.f32.gmra.mxu0 %v901
    %v969 = vpop.f32.mrf.mxu0
    %v970 = vadd.f32 %v44, %v969
    %v971 = vpop.f32.mrf.mxu0
    %972 = vdwg.mxu0
    %v974 = vrot.slane %v970, 1
    %v976 = vadd.f32 %v126, %v974
    %v977 = vxor.u32 %v976, 2147483648
    %v978 = vmul.f32 %v977, 1.442695
    %v979 = vpow.pop %v978
    %v980 = vadd.f32 %v979, 1.0
    %v981 = vrcp.pop %v980
    %v982 = vmul.f32 1.0, %v981
    %983 = vrot.lane.b32.xlu0 %v974, 64
    %v984 = vpop.permute.xlu0 %983
    %v986 = vmul.f32 %v982, %v984
    %988 = vrot.lane.b32.xlu0 %v986, 64
    %v989 = vpop.permute.xlu0 %988
    %v991 = vadd.f32 %v126, %v989
    %v992 = vtanh.pop %v991
    %v994 = vrot.slane %v992, 1
    %v996 = vsub.f32 %v896, %v994
    %v998 = vrot.slane %v996, 7
    %999 = vrot.lane.b32.xlu0 %v998, 96
    %v1000 = vpop.permute.xlu0 %999
    %v1002 = vmul.f32 %v982, %v1000
    %1004 = vrot.lane.b32.xlu0 %v1002, 32
    %v1005 = vpop.permute.xlu0 %1004
    %v1007 = vadd.f32 %v992, %v1005
    %vm1008 = vcmask 1040384
    %v1009 = vsel %vm1008, %v231, %v341
    %vm1010 = vcmask 1041408
    %v1011 = vsel %vm1010, %v1009, %v452
    %vm1012 = vcmask 1042432
    %v1013 = vsel %vm1012, %v1011, %v563
    %vm1014 = vcmask 1043456
    %v1015 = vsel %vm1014, %v1013, %v674
    %vm1016 = vcmask 1044480
    %v1017 = vsel %vm1016, %v1015, %v785
    %vm1018 = vcmask 1045504
    %v1019 = vsel %vm1018, %v1017, %v896
    %vm1020 = vcmask 1046528
    %v1021 = vsel %vm1020, %v1019, %v1007
    %v1022 = vlaneseq
    %v1023 = vshrl.u32 %v1022, 7
    %v1024 = vsub.s32 0, %v1023
    %v1025 = vrot.slane %v49, %v1024
    %1027 = vrot.lane.b32.xlu0 %v1021, 64
    %v1028 = vpop.permute.xlu0 %1027
    %v1029 = vsel %vm129, %v1028, 0
    %1031 = vmatprep.subr.mxu0 0.0
    %1032 = vmatpush1.msra.mxu0 0.0
    %1033 = vmatprep.subr.mxu0 0.0
    %1034 = vmatpush1.msra.mxu0 0.0
    %1035 = vmatprep.subr.mxu0 0.0
    %1036 = vmatpush1.msra.mxu0 0.0
    %1037 = vmatprep.subr.mxu0 0.0
    %1038 = vmatpush1.msra.mxu0 0.0
    %1039 = vmatprep.subr.mxu0 0.0
    %1040 = vmatpush1.msra.mxu0 0.0
    %1041 = vmatprep.subr.mxu0 0.0
    %1042 = vmatpush1.msra.mxu0 0.0
    %1043 = vmatprep.subr.mxu0 0.0
    %1044 = vmatpush1.msra.mxu0 0.0
    %1045 = vmatprep.subr.mxu0 0.0
    %1046 = vmatpush1.msra.mxu0 0.0
    %1047 = vmatprep.subr.mxu0 0.0
    %1048 = vmatpush1.msra.mxu0 0.0
    %1049 = vmatprep.subr.mxu0 0.0
    %1050 = vmatpush1.msra.mxu0 0.0
    %1051 = vmatprep.subr.mxu0 0.0
    %1052 = vmatpush1.msra.mxu0 0.0
    %1053 = vmatprep.subr.mxu0 0.0
    %1054 = vmatpush1.msra.mxu0 0.0
    %1055 = vmatprep.subr.mxu0 0.0
    %1056 = vmatpush1.msra.mxu0 %v48
    %1057 = vmatprep.subr.mxu0 0.0
    %1058 = vmatpush1.msra.mxu0 %v47
    %1059 = vmatprep.subr.mxu0 0.0
    %1060 = vmatpush1.msra.mxu0 %v46
    %1061 = vmatprep.subr.mxu0 0.0
    %1062 = vmatpush1.msra.mxu0 %v45
    %1063 = vmatprep.subr.mxu0 0.0
    %1064 = vmatpush2.msra.mxu0 0.0
    %1065 = vmatprep.subr.mxu0 0.0
    %1066 = vmatpush2.msra.mxu0 0.0
    %1067 = vmatprep.subr.mxu0 0.0
    %1068 = vmatpush2.msra.mxu0 0.0
    %1069 = vmatprep.subr.mxu0 0.0
    %1070 = vmatpush2.msra.mxu0 0.0
    %1071 = vmatprep.subr.mxu0 0.0
    %1072 = vmatpush2.msra.mxu0 0.0
    %1073 = vmatprep.subr.mxu0 0.0
    %1074 = vmatpush2.msra.mxu0 0.0
    %1075 = vmatprep.subr.mxu0 0.0
    %1076 = vmatpush2.msra.mxu0 0.0
    %1077 = vmatprep.subr.mxu0 0.0
    %1078 = vmatpush2.msra.mxu0 0.0
    %1079 = vmatprep.subr.mxu0 0.0
    %1080 = vmatpush2.msra.mxu0 0.0
    %1081 = vmatprep.subr.mxu0 0.0
    %1082 = vmatpush2.msra.mxu0 0.0
    %1083 = vmatprep.subr.mxu0 0.0
    %1084 = vmatpush2.msra.mxu0 0.0
    %1085 = vmatprep.subr.mxu0 0.0
    %1086 = vmatpush2.msra.mxu0 0.0
    %1087 = vmatprep.subr.mxu0 0.0
    %1088 = vmatpush2.msra.mxu0 0.0
    %1089 = vmatprep.subr.mxu0 0.0
    %1090 = vmatpush2.msra.mxu0 0.0
    %1091 = vmatprep.subr.mxu0 0.0
    %1092 = vmatpush2.msra.mxu0 0.0
    %1093 = vmatprep.subr.mxu0 0.0
    %1094 = vmatpush2.msra.mxu0 0.0
    %1095 = vmatprep.mubr.f32.mxu0 0.0
    %1096 = vmatmul.mubr.f32.gmra.mxu0 %v1029
    %v1097 = vpop.f32.mrf.mxu0
    %v1098 = vadd.f32 %v1025, %v1097
    %v1099 = vpop.f32.mrf.mxu0
    %1100 = vdwg.mxu0
    %1101 = vst [vmem:[#allocation7] sm:$0xff] %v1098
    // Predicated region
    $region18: #{tpu_custom_call.1} parent=1 // pred_check
      _
    $region19: #{tpu_custom_call.1} parent=1 // pred_check_branch
      %1103 = sbr.rel (0) target = $region21
    $region20: #{tpu_custom_call.1} parent=1 // pred_region
      %s1105 = ssub.s32 128, 128
      %1106 = vsyncadd [#allocation4], %s1105
      %s1108 = sshll.u32 [#allocation7], 4
      %s1109 = int_to_ptr.vmem [resolvable:$true] %s1108
      %1111 = dma.vmem_to_hbm [thread:$0]  %s1109, 128, %s2, [#allocation4]
    $region21: #{tpu_custom_call.1} parent=1 // pred_fallthru
      _
    // Predicated region
    $region22: #{tpu_custom_call.1} parent=1 // pred_check
      _
    $region23: #{tpu_custom_call.1} parent=1 // pred_check_branch
      %1113 = sbr.rel (0) target = $region25
    $region24: #{tpu_custom_call.1} parent=1 // pred_region
      %1114 = dma.done [#allocation4], 128
    $region25: #{tpu_custom_call.1} parent=1 // pred_fallthru
      _
    %1115 = vsyncpa [#allocation3], 1
    %1116 = vsyncpa [#allocation6], 1
    %1117 = vsyncpa [#allocation4], 1

</llo_original>
